<compile_context>
chip_gen: v5e
topology: v5e:2x2
jax: 0.10.0
libtpu: 0.0.40
codegen_flags: <defaults>
</compile_context>

<pallas_src>
import math

import jax
import jax.numpy as jnp
from jax.experimental import pallas as pl
from jax.experimental.pallas import tpu as pltpu


def make_positional_encoding_table(max_h, max_w, dtype=jnp.float32):
    """Mirror of the PyTorch __init__ buffer construction (as a (max_h, max_w) table)."""
    if max_h != max_w or max_h % 2 != 0:
        # The original module's strided assignment broadcasts a (max_w, max_h//2)
        # tensor into (max_h, ceil(max_w/2)) slots; that only works square & even.
        raise ValueError("PositionalEncoding requires even max_h == max_w")
    position = jnp.arange(max_w, dtype=jnp.float32)[:, None]                   # (max_w, 1)
    div_term = jnp.exp(jnp.arange(0, max_h, 2, dtype=jnp.float32)
                       * (-math.log(10000.0) / max_w))                         # (max_h//2,)
    angles = position * div_term                                               # (max_w, max_h//2)
    pe = jnp.zeros((max_h, max_w), jnp.float32)
    pe = pe.at[:, 0::2].set(jnp.sin(angles))
    pe = pe.at[:, 1::2].set(jnp.cos(angles))
    return pe.astype(dtype)


# ----------------------------------------------------------------------------
# Kernels: (tr, LW) x-tile + (1, LW) PE slab -> broadcast add.
# ----------------------------------------------------------------------------

def _add_pe_kernel_native(x_ref, pe_ref, o_ref):
    # Add in the input dtype (f32 everywhere; bf16 natively on v6e/v7x).
    o_ref[...] = x_ref[...] + pe_ref[...]


def _add_pe_kernel_f32(x_ref, pe_ref, o_ref):
    # Upcast path for sub-f32 inputs on chips without a bf16 VALU (v5 family).
    o_ref[...] = (x_ref[...].astype(jnp.float32) + pe_ref[...]).astype(o_ref.dtype)


# ----------------------------------------------------------------------------
# Wrapper helpers.
# ----------------------------------------------------------------------------

def _device_generation():
    try:
        kind = jax.devices()[0].device_kind.lower()
    except Exception:
        return "unknown"
    if "v7" in kind:
        return "v7x"
    if "v6" in kind:
        return "v6e"
    if "v5" in kind:
        return "v5"
    return "unknown"


_GEN_BUDGET = {"v7x": 20 << 20, "v6e": 16 << 20, "v5": 12 << 20}


def _choose_row_tile(rows, lane_width, itemsize, budget_bytes):
    """Largest row tile whose double-buffered in+out footprint fits the budget."""
    max_tr = max(1, budget_bytes // (4 * lane_width * itemsize))  # 2 in + 2 out buffers
    if rows <= max_tr:
        return rows                                               # full-extent block is legal
    align = max(8, 32 // itemsize)                                # f32->8, bf16->16, int8->32
    tr = max(align, (max_tr // align) * align)
    return min(tr, rows)


def positional_encoding_forward(x, pe_table, *, vmem_budget_bytes=None, donate=False):
    """x: (B, C, H, W); pe_table: (max_h, max_w). Returns x + pe[:H, :]."""
    B, C, H, W = x.shape
    max_h, max_w = pe_table.shape
    if H > max_h:
        raise ValueError("x height exceeds max_h")
    if W != max_w:
        raise ValueError("PyTorch forward broadcast requires x width == max_w")

    gen = _device_generation()
    if vmem_budget_bytes is None:
        vmem_budget_bytes = _GEN_BUDGET.get(gen, 8 << 20)

    HW = H * W
    rows = B * C

    # Lane-density guard: fold k channels into the lane dim so the last block
    # dim is a multiple of 128 (full-width stores).  PE repeats identically per
    # (batch, channel) row, so tiling the PE row k times is semantically exact.
    k = 1
    if HW % 128 != 0:
        k = math.lcm(HW, 128) // HW
        if rows % k != 0:
            k = 1   # cannot fold evenly; keep correctness, accept masked stores
    lane_width = k * HW
    rows = rows // k

    x_flat = x.reshape(rows, lane_width)

    # PE slab in the compute dtype: native add on v6e/v7x, f32 upcast on v5.
    pe_row = pe_table[:H, :].reshape(1, HW).astype(jnp.float32)
    if k > 1:
        pe_row = jnp.tile(pe_row, (1, k))
    native_ok = (x.dtype == jnp.float32) or (gen in ("v6e", "v7x"))
    if native_ok:
        pe_flat = pe_row.astype(x.dtype)
        kernel = _add_pe_kernel_native
    else:
        pe_flat = pe_row                       # stays f32
        kernel = _add_pe_kernel_f32

    itemsize = jnp.dtype(x.dtype).itemsize
    tr = _choose_row_tile(rows, lane_width, itemsize, vmem_budget_bytes)
    grid = (pl.cdiv(rows, tr),)                # ragged last block is fine (elementwise)

    # Explicit scoped-VMEM limit derived from the actual footprint
    # (double-buffered x in + out tiles, double-buffered PE slab, slack).
    tile_bytes = tr * lane_width * itemsize
    pe_bytes = lane_width * jnp.dtype(pe_flat.dtype).itemsize
    vmem_limit = int(4 * tile_bytes + 2 * pe_bytes + (4 << 20))

    out_flat = pl.pallas_call(
        kernel,
        out_shape=jax.ShapeDtypeStruct((rows, lane_width), x.dtype),
        grid_spec=pltpu.PrefetchScalarGridSpec(
            num_scalar_prefetch=0,
            grid=grid,
            in_specs=[
                pl.BlockSpec((tr, lane_width), lambda r: (r, 0)),
                pl.BlockSpec((1, lane_width), lambda r: (0, 0)),
            ],
            out_specs=pl.BlockSpec((tr, lane_width), lambda r: (r, 0)),
        ),
        compiler_params=pltpu.CompilerParams(
            dimension_semantics=("parallel",),
            vmem_limit_bytes=vmem_limit),
        input_output_aliases=({0: 0} if donate else {}),
    )(x_flat, pe_flat)

    return out_flat.reshape(B, C, H, W)


def _reference(x, pe_table):
    """Pure-JAX mirror of the PyTorch forward."""
    H = x.shape[2]
    return x + pe_table[None, None, :H, :].astype(x.dtype)


if __name__ == "__main__":
    B, C, H, W = 2, 4, 16, 16
    max_h = max_w = 16

    key = jax.random.PRNGKey(0)
    x = jax.random.normal(key, (B, C, H, W), dtype=jnp.float32)

    pe_table = make_positional_encoding_table(max_h, max_w)   # init-time buffer
    out = positional_encoding_forward(x, pe_table)
    out = jax.block_until_ready(out)

    ref = _reference(x, pe_table)
    assert out.shape == x.shape and out.dtype == x.dtype
    assert jnp.allclose(out, ref, atol=1e-6, rtol=1e-6), "mismatch vs reference"

    print("KERNEL_OK")
</pallas_src>

<mosaic_0001>
module attributes {stable_mosaic.version = 11 : i64} {
  func.func @_add_pe_kernel_native(%arg0: i32, %arg1: memref<8x256xf32, #tpu.memory_space<vmem>>, %arg2: memref<1x256xf32, #tpu.memory_space<vmem>>, %arg3: memref<8x256xf32, #tpu.memory_space<vmem>>) attributes {dimension_semantics = [#tpu.dimension_semantics<parallel>], iteration_bounds = array<i64: 1>, scalar_prefetch = 0 : i64, scratch_operands = 0 : i64, tpu.core_type = #tpu.core_type<tc>, window_params = [{transform_indices = @transform_0, window_bounds = array<i64: 8, 256>}, {pipeline_mode = #tpu.pipeline_mode<synchronous>, transform_indices = @transform_1, window_bounds = array<i64: 1, 256>}, {transform_indices = @transform_2, window_bounds = array<i64: 8, 256>}]} {
    %c0 = arith.constant 0 : index
    %c0_0 = arith.constant 0 : index
    %0 = vector.load %arg1[%c0, %c0_0] : memref<8x256xf32, #tpu.memory_space<vmem>>, vector<8x256xf32>
    %c0_1 = arith.constant 0 : index
    %c0_2 = arith.constant 0 : index
    %1 = vector.load %arg2[%c0_1, %c0_2] : memref<1x256xf32, #tpu.memory_space<vmem>>, vector<1x256xf32>
    %2 = vector.broadcast %1 : vector<1x256xf32> to vector<8x256xf32>
    %3 = arith.addf %0, %2 : vector<8x256xf32>
    %c0_3 = arith.constant 0 : index
    %c0_4 = arith.constant 0 : index
    %4 = vector.load %arg3[%c0_3, %c0_4] : memref<8x256xf32, #tpu.memory_space<vmem>>, vector<8x256xf32>
    tpu.vector_store %arg3[%c0_3, %c0_4], %3 {strides = array<i32>} : memref<8x256xf32, #tpu.memory_space<vmem>>, vector<8x256xf32>,
    return
  }
  func.func @transform_0(%arg0: i32) -> (i32, i32) {
    %c0_i32 = arith.constant 0 : i32
    %c0_i32_0 = arith.constant 0 : i32
    return %arg0, %c0_i32 : i32, i32
  }
  func.func @transform_1(%arg0: i32) -> (i32, i32) {
    %c0_i32 = arith.constant 0 : i32
    %c0_i32_0 = arith.constant 0 : i32
    %c0_i32_1 = arith.constant 0 : i32
    return %c0_i32, %c0_i32_0 : i32, i32
  }
  func.func @transform_2(%arg0: i32) -> (i32, i32) {
    %c0_i32 = arith.constant 0 : i32
    %c0_i32_0 = arith.constant 0 : i32
    return %arg0, %c0_i32 : i32, i32
  }
}

</mosaic_0001>

<llo_original>
// kernel: tpu_custom_call.1
$region0: #{tpu_custom_call.1}
  #allocation0 [shape = 'u32[]', space=smem, size = 0x4, offset = 0x4, fixed_abs, tag = 'smem constant byte address 0x4 - core index']
  #allocation1 [shape = 'u32[72,128]{1,0:T(1,128)}', space=vmem, size = 0x9000, scoped, tag = 'internal scratch']
  %s0 = inlined_call_operand.hbm [shape: f32[8,256], index: 0, kind: input, shape index: {}]
  %s1 = inlined_call_operand.hbm [shape: f32[1,256], index: 1, kind: input, shape index: {}]
  %s2 = inlined_call_operand.hbm [shape: f32[8,256], index: 2, kind: output, shape index: {}]
  %s3 = sld [smem:[#allocation0]]
  $region26: #{tpu_custom_call.1} parent=0
    _
  %s5 = ssub.s32 1, %s3
  %s6 = scalar_select 0, %s5, %s3
  $region1: #{tpu_custom_call.1} parent=0
    #allocation2 [shape = 'u8[8192]{0}', space=vmem, size = 0x2000, scoped, tag = 'input window, operand 0, single buffered']
    #allocation3 [shape = 's32[1]{0}', space=sflag, size = 0x4, scoped, tag = 'scoped memory for tpu_custom_call.1']
    #allocation4 [shape = 's32[1]{0}', space=sflag, size = 0x4, scoped, tag = 'scoped memory for tpu_custom_call.1']
    #allocation5 [shape = 'u8[1024]{0}', space=vmem, size = 0x400, scoped, tag = 'input window, operand 1, single buffered']
    #allocation6 [shape = 's32[1]{0}', space=sflag, size = 0x4, scoped, tag = 'scoped memory for tpu_custom_call.1']
    #allocation7 [shape = 'u8[8192]{0}', space=vmem, size = 0x2000, scoped, tag = 'output window, operand 0, single buffered']
    %7 = vsyncpa [#allocation3], 0
    %8 = vsyncpa [#allocation6], 0
    %9 = vsyncpa [#allocation4], 0
    // Predicated region
    $region2: #{tpu_custom_call.1} parent=1 // pred_check
      _
    $region3: #{tpu_custom_call.1} parent=1 // pred_check_branch
      %11 = sbr.rel (0) target = $region5
    $region4: #{tpu_custom_call.1} parent=1 // pred_region
      %13 = vsyncadd [#allocation3], 0
      %s15 = sshll.u32 %s0, 4
      %s16 = int_to_ptr.hbm [resolvable:$true] %s15
      %s17 = sshll.u32 [#allocation2], 4
      %s18 = int_to_ptr.vmem [resolvable:$true] %s17
      %20 = dma.hbm_to_vmem [thread:$0]  %s16, 256, %s18, [#allocation3]
    $region5: #{tpu_custom_call.1} parent=1 // pred_fallthru
      _
    // Predicated region
    $region6: #{tpu_custom_call.1} parent=1 // pred_check
      _
    $region7: #{tpu_custom_call.1} parent=1 // pred_check_branch
      %22 = sbr.rel (0) target = $region9
    $region8: #{tpu_custom_call.1} parent=1 // pred_region
      %24 = vsyncadd [#allocation6], 0
      %s26 = sshll.u32 %s1, 4
      %s27 = int_to_ptr.hbm [resolvable:$true] %s26
      %s28 = sshll.u32 [#allocation5], 4
      %s29 = int_to_ptr.vmem [resolvable:$true] %s28
      %31 = dma.hbm_to_vmem [thread:$0]  %s27, 32, %s29, [#allocation6]
    $region9: #{tpu_custom_call.1} parent=1 // pred_fallthru
      _
    // Predicated region
    $region10: #{tpu_custom_call.1} parent=1 // pred_check
      _
    $region11: #{tpu_custom_call.1} parent=1 // pred_check_branch
      %33 = sbr.rel (0) target = $region13
    $region12: #{tpu_custom_call.1} parent=1 // pred_region
      %35 = dma.done [#allocation3], 256
    $region13: #{tpu_custom_call.1} parent=1 // pred_fallthru
      _
    // Predicated region
    $region14: #{tpu_custom_call.1} parent=1 // pred_check
      _
    $region15: #{tpu_custom_call.1} parent=1 // pred_check_branch
      %37 = sbr.rel (0) target = $region17
    $region16: #{tpu_custom_call.1} parent=1 // pred_region
      %39 = dma.done [#allocation6], 32
    $region17: #{tpu_custom_call.1} parent=1 // pred_fallthru
      _
    %v40 = vld [vmem:[#allocation2] sm:$0xff]
    %v41 = vld [vmem:[#allocation2 + $0x8] sm:$0xff]
    %v42 = vld [vmem:[#allocation5] sm:$0x3]
    %v44 = vperm.slane %v42, 0
    %v45 = vperm.slane %v42, 1
    %v48 = vadd.f32 %v40, %v44
    %v49 = vadd.f32 %v41, %v45
    %50 = vst [vmem:[#allocation7] sm:$0xff] %v48
    %51 = vst [vmem:[#allocation7 + $0x8] sm:$0xff] %v49
    // Predicated region
    $region18: #{tpu_custom_call.1} parent=1 // pred_check
      _
    $region19: #{tpu_custom_call.1} parent=1 // pred_check_branch
      %53 = sbr.rel (0) target = $region21
    $region20: #{tpu_custom_call.1} parent=1 // pred_region
      %55 = vsyncadd [#allocation4], 0
      %s57 = sshll.u32 [#allocation7], 4
      %s58 = int_to_ptr.vmem [resolvable:$true] %s57
      %s59 = sshll.u32 %s2, 4
      %s60 = int_to_ptr.hbm [resolvable:$true] %s59
      %62 = dma.vmem_to_hbm [thread:$0]  %s58, 256, %s60, [#allocation4]
    $region21: #{tpu_custom_call.1} parent=1 // pred_fallthru
      _
    // Predicated region
    $region22: #{tpu_custom_call.1} parent=1 // pred_check
      _
    $region23: #{tpu_custom_call.1} parent=1 // pred_check_branch
      %64 = sbr.rel (0) target = $region25
    $region24: #{tpu_custom_call.1} parent=1 // pred_region
      %66 = dma.done [#allocation4], 256
    $region25: #{tpu_custom_call.1} parent=1 // pred_fallthru
      _
    %67 = vsyncpa [#allocation3], 1
    %68 = vsyncpa [#allocation6], 1
    %69 = vsyncpa [#allocation4], 1

</llo_original>
